<compile_context>
chip_gen: v5e
topology: v5e:2x2
jax: 0.10.0
libtpu: 0.0.40
codegen_flags: <defaults>
</compile_context>

<pallas_src>
import functools
import math

import jax
import jax.numpy as jnp
from jax.experimental import pallas as pl
from jax.experimental.pallas import tpu as pltpu

DEFAULT_TM = 2048  # target row tile (sweep 1024/2048/4096); aligned & clamped per call below


# ---------------------------------------------------------------------------
# Pallas kernels
# ---------------------------------------------------------------------------
def _relu(x):
    return jnp.maximum(x, 0.0)


def _trunk_and_head(x_ref, w1_ref, b1_ref, w2_ref, b2_ref,
                    wh1_ref, bh1_ref, wh2_ref, bh2_ref):
    """deconstruction_nn trunk (w3 folded away) + packed [visibility | agent-mean] head.

    Returns (h2_f32, packed): h2 is the second trunk activation (f32) consumed by the u path;
    packed[:, 0] is the Bernoulli prob (sigmoid applied), packed[:, 1:] the agent Normal mean.
    """
    x = x_ref[...]
    h1 = _relu(jnp.dot(x, w1_ref[...], preferred_element_type=jnp.float32) + b1_ref[...])
    h2 = _relu(jnp.dot(h1.astype(jnp.bfloat16), w2_ref[...],
                       preferred_element_type=jnp.float32) + b2_ref[...])
    h2_bf = h2.astype(jnp.bfloat16)

    # packed heads with w3 folded in at pack time:
    #   wh1 = w3 @ [wv1|wm1], bh1 = b3 @ [wv1|wm1] + [bv1|bm1], wh2 = blockdiag(wv2, wm2)
    hh = _relu(jnp.dot(h2_bf, wh1_ref[...], preferred_element_type=jnp.float32) + bh1_ref[...])
    head = jnp.dot(hh.astype(jnp.bfloat16), wh2_ref[...],
                   preferred_element_type=jnp.float32) + bh2_ref[...]
    lane = jax.lax.broadcasted_iota(jnp.int32, head.shape, 1)
    packed = jnp.where(lane == 0, jax.nn.sigmoid(head), head)
    return h2, packed


def _kernel_with_u(x_ref,
                   w1_ref, b1_ref, w2_ref, b2_ref,
                   wh1_ref, bh1_ref, wh2_ref, bh2_ref,
                   wu1_ref, bu1_ref, wu2_ref, bu2_ref,
                   out_ref, u_ref, h2_scr):
    h2, packed = _trunk_and_head(x_ref, w1_ref, b1_ref, w2_ref, b2_ref,
                                 wh1_ref, bh1_ref, wh2_ref, bh2_ref)
    out_ref[...] = packed

    # u path (fused, no MXU for the reduction): rows within a tile are (group, agent)-ordered,
    # so the agent group-sum over h2 is A strided sublane reads from a small VMEM scratch.
    # decoder_u with w3 folded in: wu1 = w3 @ wu1_raw, bu1 = A*(b3 @ wu1_raw) + bu1_raw.
    h2_scr[...] = h2
    groups = u_ref.shape[0]
    n_agents = h2_scr.shape[0] // groups
    u_in = h2_scr[pl.ds(0, groups, stride=n_agents), :]
    for a in range(1, n_agents):
        u_in = u_in + h2_scr[pl.ds(a, groups, stride=n_agents), :]
    hu = _relu(jnp.dot(u_in.astype(jnp.bfloat16), wu1_ref[...],
                       preferred_element_type=jnp.float32) + bu1_ref[...])
    u_ref[...] = jnp.dot(hu.astype(jnp.bfloat16), wu2_ref[...],
                         preferred_element_type=jnp.float32) + bu2_ref[...]


def _kernel_no_u(x_ref,
                 w1_ref, b1_ref, w2_ref, b2_ref,
                 wh1_ref, bh1_ref, wh2_ref, bh2_ref,
                 out_ref):
    _, packed = _trunk_and_head(x_ref, w1_ref, b1_ref, w2_ref, b2_ref,
                                wh1_ref, bh1_ref, wh2_ref, bh2_ref)
    out_ref[...] = packed


# ---------------------------------------------------------------------------
# Wrapper
# ---------------------------------------------------------------------------
def _full_spec(shape):
    # all full-spec operands here are 2D (weights, biases)
    return pl.BlockSpec(shape, lambda i: (0, 0))


def obs_decoder_forward(params, theta, s, cur_flag, prev_acts,
                        agent_obs_size, u_obs_size, with_global_feature=True,
                        tm_target=DEFAULT_TM):
    """Pallas implementation of ObsDecoderNet.forward.

    Returns a dict with the distribution parameters:
      vis_probs  [B, P, A, 1]              (Bernoulli probs)
      agent_mean [B, P, A, agent_obs_size] (Normal mean)
      agent_var  scalar 1.0                (broadcastable; PyTorch overrides var with ones)
      u_mean     [B, P, u_obs_size]        (Normal mean, if with_global_feature)
      u_var      scalar 1.0                (broadcastable, if with_global_feature)
    """
    B, P, A, h_dim = theta.shape
    s_dim = s.shape[-1]
    act_dim = prev_acts.shape[-1]
    in_dim = h_dim + s_dim + 1 + act_dim
    N = B * P * A
    gnn_hdim2 = params["w2"].shape[1]

    # glue: cast operands to bf16 BEFORE the concat so the concat/reshape/pad chain stays
    # bf16 (half the HBM traffic of an f32 concat followed by a cast)
    bf = lambda t: t.astype(jnp.bfloat16)
    x = jnp.concatenate([bf(theta), bf(s), bf(cur_flag), bf(prev_acts)], axis=-1)
    x = x.reshape(N, in_dim)

    # Row tile: multiple of lcm(8*A, 16) so (a) every tile holds only whole agent groups and
    # the per-tile u output (tm // A rows) stays sublane-aligned, (b) bf16 x tiles stay
    # packed-sublane aligned.  Keep >=2 grid steps when possible so both v7x TensorCores
    # get work ("parallel" dimension_semantics shards grid steps across cores).
    unit = math.lcm(8 * A, 16)
    rows_needed = -(-N // unit) * unit
    tm_cap = max(unit, (tm_target // unit) * unit)
    if rows_needed >= 2 * unit:
        tm = max(unit, min(tm_cap, (rows_needed // (2 * unit)) * unit))
    else:
        tm = unit
    n_pad = -(-N // tm) * tm
    if n_pad != N:
        # padding is appended only at the end of the flattened [N, feat] view (invariant
        # relied on when slicing padded rows/groups off below)
        x = jnp.pad(x, ((0, n_pad - N), (0, 0)))
    grid = (n_pad // tm,)

    head_w = 1 + agent_obs_size
    row_spec = lambda width: pl.BlockSpec((tm, width), lambda i: (i, 0))
    trunk_keys = ["w1", "b1", "w2", "b2", "wh1", "bh1", "wh2", "bh2"]

    if with_global_feature:
        u_keys = ["wu1", "bu1", "wu2", "bu2"]
        args = [x] + [params[k] for k in trunk_keys + u_keys]
        in_specs = ([row_spec(in_dim)] +
                    [_full_spec(params[k].shape) for k in trunk_keys + u_keys])
        groups_per_tile = tm // A
        out_specs = [row_spec(head_w),
                     pl.BlockSpec((groups_per_tile, u_obs_size), lambda i: (i, 0))]
        out_shape = (jax.ShapeDtypeStruct((n_pad, head_w), jnp.float32),
                     jax.ShapeDtypeStruct((n_pad // A, u_obs_size), jnp.float32))
        packed, u_mean_p = pl.pallas_call(
            _kernel_with_u,
            grid=grid,
            in_specs=in_specs,
            out_specs=out_specs,
            out_shape=out_shape,
            scratch_shapes=[pltpu.VMEM((tm, gnn_hdim2), jnp.float32)],
            compiler_params=pltpu.CompilerParams(dimension_semantics=("parallel",)),
        )(*args)
    else:
        args = [x] + [params[k] for k in trunk_keys]
        in_specs = [row_spec(in_dim)] + [_full_spec(params[k].shape) for k in trunk_keys]
        packed = pl.pallas_call(
            _kernel_no_u,
            grid=grid,
            in_specs=in_specs,
            out_specs=row_spec(head_w),
            out_shape=jax.ShapeDtypeStruct((n_pad, head_w), jnp.float32),
            compiler_params=pltpu.CompilerParams(dimension_semantics=("parallel",)),
        )(*args)
        u_mean_p = None

    packed = packed[:N]
    vis_probs = packed[:, :1].reshape(B, P, A, 1)
    agent_mean = packed[:, 1:].reshape(B, P, A, agent_obs_size)
    out = {"vis_probs": vis_probs,
           "agent_mean": agent_mean,
           # PyTorch: torch.ones_like(agent_var) -> constant ones; returned broadcastable
           # instead of materializing an HBM array the size of agent_mean.
           "agent_var": jnp.asarray(1.0, jnp.float32)}

    if with_global_feature:
        u_mean = u_mean_p[:B * P].reshape(B, P, u_obs_size)
        out["u_mean"] = u_mean
        out["u_var"] = jnp.asarray(1.0, jnp.float32)  # PyTorch: torch.ones_like(u_var)
    return out


# ---------------------------------------------------------------------------
# Parameter init (PyTorch nn.Linear default) + packing into kernel-ready form
# ---------------------------------------------------------------------------
def _linear(key, fan_in, fan_out):
    kw, kb = jax.random.split(key)
    bound = 1.0 / jnp.sqrt(fan_in)
    w = jax.random.uniform(kw, (fan_in, fan_out), jnp.float32, -bound, bound)
    b = jax.random.uniform(kb, (1, fan_out), jnp.float32, -bound, bound)
    return w, b


def init_params(key, in_dim, gnn_hdim1, gnn_hdim2, decoder_hid_dims,
                agent_obs_size, u_obs_size):
    """Raw per-layer parameters, mirroring the PyTorch module layout (float32)."""
    d_last, d_first = decoder_hid_dims[-1], decoder_hid_dims[0]
    keys = jax.random.split(key, 9)
    p = {}
    p["w1"], p["b1"] = _linear(keys[0], in_dim, gnn_hdim1)
    p["w2"], p["b2"] = _linear(keys[1], gnn_hdim1, gnn_hdim2)
    p["w3"], p["b3"] = _linear(keys[2], gnn_hdim2, d_last)
    p["wv1"], p["bv1"] = _linear(keys[3], d_last, d_first)
    p["wv2"], p["bv2"] = _linear(keys[4], d_first, 1)
    p["wm1"], p["bm1"] = _linear(keys[5], d_last, d_first)
    p["wm2"], p["bm2"] = _linear(keys[6], d_first, agent_obs_size)
    p["wu1"], p["bu1"] = _linear(keys[7], d_last, d_first)
    p["wu2"], p["bu2"] = _linear(keys[8], d_first, u_obs_size)
    return p


def pack_params(raw, num_agents, compute_dtype=jnp.bfloat16):
    """One-time packing (all algebra in f32, then cast to bf16 weights / f32 biases):
      - merge visibility / agent-mean heads into a single matmul pair
      - fold the trunk's third linear (w3, b3) into the head and u weights, so the kernel
        never materializes n_out and runs one fewer matmul per row tile
      - the u group-sum is taken over h2, so the agent count folds into the u bias."""
    d_first = raw["wv1"].shape[1]
    obs = raw["wm2"].shape[1]
    wh1 = jnp.concatenate([raw["wv1"], raw["wm1"]], axis=1)           # [d_last, 2*d_first]
    bh1 = jnp.concatenate([raw["bv1"], raw["bm1"]], axis=1)           # [1, 2*d_first]
    wh1_f = raw["w3"] @ wh1                                           # [gnn_hdim2, 2*d_first]
    bh1_f = raw["b3"] @ wh1 + bh1                                     # [1, 2*d_first]
    wh2 = jnp.zeros((2 * d_first, 1 + obs), jnp.float32)
    wh2 = wh2.at[:d_first, :1].set(raw["wv2"]).at[d_first:, 1:].set(raw["wm2"])
    bh2 = jnp.concatenate([raw["bv2"], raw["bm2"]], axis=1)           # [1, 1+obs]

    packed = {"w1": raw["w1"], "b1": raw["b1"], "w2": raw["w2"], "b2": raw["b2"],
              "wh1": wh1_f, "bh1": bh1_f, "wh2": wh2, "bh2": bh2}
    if "wu1" in raw:
        packed["wu1"] = raw["w3"] @ raw["wu1"]                        # [gnn_hdim2, d_first]
        packed["bu1"] = float(num_agents) * (raw["b3"] @ raw["wu1"]) + raw["bu1"]
        packed["wu2"] = raw["wu2"]
        packed["bu2"] = raw["bu2"]
    return {k: (v.astype(jnp.float32) if k.startswith("b") else v.astype(compute_dtype))
            for k, v in packed.items()}


# ---------------------------------------------------------------------------
# Pure-JAX reference (f32, unfolded) for correctness checking
# ---------------------------------------------------------------------------
def _reference_forward(raw, theta, s, cur_flag, prev_acts,
                       agent_obs_size, u_obs_size, with_global_feature=True):
    B, P, A, _ = theta.shape
    x = jnp.concatenate([theta, s, cur_flag, prev_acts], axis=-1).reshape(B * P * A, -1)
    relu = lambda v: jnp.maximum(v, 0.0)
    n_out = relu(x @ raw["w1"] + raw["b1"])
    n_out = relu(n_out @ raw["w2"] + raw["b2"])
    n_out = n_out @ raw["w3"] + raw["b3"]
    vis = jax.nn.sigmoid(relu(n_out @ raw["wv1"] + raw["bv1"]) @ raw["wv2"] + raw["bv2"])
    mean = relu(n_out @ raw["wm1"] + raw["bm1"]) @ raw["wm2"] + raw["bm2"]
    out = {"vis_probs": vis.reshape(B, P, A, 1),
           "agent_mean": mean.reshape(B, P, A, agent_obs_size)}
    if with_global_feature:
        u_out = n_out.reshape(B, P, A, -1).sum(axis=2).reshape(B * P, -1)
        u_mean = relu(u_out @ raw["wu1"] + raw["bu1"]) @ raw["wu2"] + raw["bu2"]
        out["u_mean"] = u_mean.reshape(B, P, u_obs_size)
    return out


# ---------------------------------------------------------------------------
if __name__ == "__main__":
    key = jax.random.PRNGKey(0)
    k_theta, k_s, k_i, k_act, k_params = jax.random.split(key, 5)

    # small shapes consistent with the module's forward
    B, P, A = 2, 4, 4                      # batch, particles, num_agents
    h_dim, s_dim, action_encoding = 4, 6, 5
    gnn_hdim1, gnn_hdim2 = 32, 32
    decoder_hid_dims = [24, 16]
    agent_obs_size, u_obs_size = 10, 12
    in_dim = h_dim + s_dim + 1 + action_encoding

    theta = jax.random.normal(k_theta, (B, P, A, h_dim), jnp.float32)
    s = jax.random.normal(k_s, (B, P, A, s_dim), jnp.float32)
    cur_flag = (jax.random.uniform(k_i, (B, P, A, 1)) > 0.5).astype(jnp.float32)
    prev_acts = jax.random.normal(k_act, (B, P, A, action_encoding), jnp.float32)

    raw_params = init_params(k_params, in_dim, gnn_hdim1, gnn_hdim2, decoder_hid_dims,
                             agent_obs_size, u_obs_size)
    kernel_params = pack_params(raw_params, num_agents=A)   # one-time packing, not per call

    fwd = jax.jit(functools.partial(obs_decoder_forward,
                                    agent_obs_size=agent_obs_size,
                                    u_obs_size=u_obs_size,
                                    with_global_feature=True))
    out = jax.block_until_ready(fwd(kernel_params, theta, s, cur_flag, prev_acts))

    assert out["vis_probs"].shape == (B, P, A, 1)
    assert out["agent_mean"].shape == (B, P, A, agent_obs_size)
    assert out["u_mean"].shape == (B, P, u_obs_size)
    # variances are all-ones in the PyTorch forward; returned as broadcastable scalars
    assert jnp.shape(out["agent_var"]) == () and float(out["agent_var"]) == 1.0
    assert jnp.shape(out["u_var"]) == () and float(out["u_var"]) == 1.0

    ref = _reference_forward(raw_params, theta, s, cur_flag, prev_acts,
                             agent_obs_size, u_obs_size, with_global_feature=True)
    for name in ("vis_probs", "agent_mean", "u_mean"):
        assert jnp.allclose(out[name], ref[name], atol=5e-2, rtol=5e-2), name

    print("KERNEL_OK")
</pallas_src>

<mosaic_0001>
module attributes {stable_mosaic.version = 11 : i64} {
  func.func @_kernel_with_u(%arg0: i32, %arg1: memref<32x16xbf16, #tpu.memory_space<vmem>>, %arg2: memref<16x32xbf16, #tpu.memory_space<vmem>>, %arg3: memref<1x32xf32, #tpu.memory_space<vmem>>, %arg4: memref<32x32xbf16, #tpu.memory_space<vmem>>, %arg5: memref<1x32xf32, #tpu.memory_space<vmem>>, %arg6: memref<32x48xbf16, #tpu.memory_space<vmem>>, %arg7: memref<1x48xf32, #tpu.memory_space<vmem>>, %arg8: memref<48x11xbf16, #tpu.memory_space<vmem>>, %arg9: memref<1x11xf32, #tpu.memory_space<vmem>>, %arg10: memref<32x24xbf16, #tpu.memory_space<vmem>>, %arg11: memref<1x24xf32, #tpu.memory_space<vmem>>, %arg12: memref<24x12xbf16, #tpu.memory_space<vmem>>, %arg13: memref<1x12xf32, #tpu.memory_space<vmem>>, %arg14: memref<32x11xf32, #tpu.memory_space<vmem>>, %arg15: memref<8x12xf32, #tpu.memory_space<vmem>>, %arg16: memref<32x32xf32, #tpu.memory_space<vmem>>) attributes {dimension_semantics = [#tpu.dimension_semantics<parallel>], iteration_bounds = array<i64: 1>, scalar_prefetch = 0 : i64, scratch_operands = 1 : i64, tpu.core_type = #tpu.core_type<tc>, window_params = [{transform_indices = @transform_0, window_bounds = array<i64: 32, 16>}, {pipeline_mode = #tpu.pipeline_mode<synchronous>, transform_indices = @transform_1, window_bounds = array<i64: 16, 32>}, {pipeline_mode = #tpu.pipeline_mode<synchronous>, transform_indices = @transform_2, window_bounds = array<i64: 1, 32>}, {pipeline_mode = #tpu.pipeline_mode<synchronous>, transform_indices = @transform_3, window_bounds = array<i64: 32, 32>}, {pipeline_mode = #tpu.pipeline_mode<synchronous>, transform_indices = @transform_4, window_bounds = array<i64: 1, 32>}, {pipeline_mode = #tpu.pipeline_mode<synchronous>, transform_indices = @transform_5, window_bounds = array<i64: 32, 48>}, {pipeline_mode = #tpu.pipeline_mode<synchronous>, transform_indices = @transform_6, window_bounds = array<i64: 1, 48>}, {pipeline_mode = #tpu.pipeline_mode<synchronous>, transform_indices = @transform_7, window_bounds = array<i64: 48, 11>}, {pipeline_mode = #tpu.pipeline_mode<synchronous>, transform_indices = @transform_8, window_bounds = array<i64: 1, 11>}, {pipeline_mode = #tpu.pipeline_mode<synchronous>, transform_indices = @transform_9, window_bounds = array<i64: 32, 24>}, {pipeline_mode = #tpu.pipeline_mode<synchronous>, transform_indices = @transform_10, window_bounds = array<i64: 1, 24>}, {pipeline_mode = #tpu.pipeline_mode<synchronous>, transform_indices = @transform_11, window_bounds = array<i64: 24, 12>}, {pipeline_mode = #tpu.pipeline_mode<synchronous>, transform_indices = @transform_12, window_bounds = array<i64: 1, 12>}, {transform_indices = @transform_13, window_bounds = array<i64: 32, 11>}, {transform_indices = @transform_14, window_bounds = array<i64: 8, 12>}]} {
    %c0 = arith.constant 0 : index
    %c0_0 = arith.constant 0 : index
    %0 = vector.load %arg1[%c0, %c0_0] : memref<32x16xbf16, #tpu.memory_space<vmem>>, vector<32x16xbf16>
    %c0_1 = arith.constant 0 : index
    %c0_2 = arith.constant 0 : index
    %1 = vector.load %arg2[%c0_1, %c0_2] : memref<16x32xbf16, #tpu.memory_space<vmem>>, vector<16x32xbf16>
    %cst = arith.constant dense<0.000000e+00> : vector<32x32xf32>
    %2 = tpu.matmul %0, %1, %cst {dimension_numbers = #tpu.dot_dimension_numbers<[1], [0], [0], [1], [0, 0, 1, 1], [], []>} : vector<32x16xbf16>, vector<16x32xbf16>, vector<32x32xf32> -> vector<32x32xf32>
    %c0_3 = arith.constant 0 : index
    %c0_4 = arith.constant 0 : index
    %3 = vector.load %arg3[%c0_3, %c0_4] : memref<1x32xf32, #tpu.memory_space<vmem>>, vector<1x32xf32>
    %4 = vector.broadcast %3 : vector<1x32xf32> to vector<32x32xf32>
    %5 = arith.addf %2, %4 : vector<32x32xf32>
    %cst_5 = arith.constant 0.000000e+00 : f32
    %6 = vector.broadcast %cst_5 : f32 to vector<32x32xf32>
    %7 = arith.maximumf %5, %6 : vector<32x32xf32>
    %8 = arith.truncf %7 : vector<32x32xf32> to vector<32x32xbf16>
    %c0_6 = arith.constant 0 : index
    %c0_7 = arith.constant 0 : index
    %9 = vector.load %arg4[%c0_6, %c0_7] : memref<32x32xbf16, #tpu.memory_space<vmem>>, vector<32x32xbf16>
    %cst_8 = arith.constant dense<0.000000e+00> : vector<32x32xf32>
    %10 = tpu.matmul %8, %9, %cst_8 {dimension_numbers = #tpu.dot_dimension_numbers<[1], [0], [0], [1], [0, 0, 1, 1], [], []>} : vector<32x32xbf16>, vector<32x32xbf16>, vector<32x32xf32> -> vector<32x32xf32>
    %c0_9 = arith.constant 0 : index
    %c0_10 = arith.constant 0 : index
    %11 = vector.load %arg5[%c0_9, %c0_10] : memref<1x32xf32, #tpu.memory_space<vmem>>, vector<1x32xf32>
    %12 = vector.broadcast %11 : vector<1x32xf32> to vector<32x32xf32>
    %13 = arith.addf %10, %12 : vector<32x32xf32>
    %cst_11 = arith.constant 0.000000e+00 : f32
    %14 = vector.broadcast %cst_11 : f32 to vector<32x32xf32>
    %15 = arith.maximumf %13, %14 : vector<32x32xf32>
    %16 = arith.truncf %15 : vector<32x32xf32> to vector<32x32xbf16>
    %c0_12 = arith.constant 0 : index
    %c0_13 = arith.constant 0 : index
    %17 = vector.load %arg6[%c0_12, %c0_13] : memref<32x48xbf16, #tpu.memory_space<vmem>>, vector<32x48xbf16>
    %cst_14 = arith.constant dense<0.000000e+00> : vector<32x48xf32>
    %18 = tpu.matmul %16, %17, %cst_14 {dimension_numbers = #tpu.dot_dimension_numbers<[1], [0], [0], [1], [0, 0, 1, 1], [], []>} : vector<32x32xbf16>, vector<32x48xbf16>, vector<32x48xf32> -> vector<32x48xf32>
    %c0_15 = arith.constant 0 : index
    %c0_16 = arith.constant 0 : index
    %19 = vector.load %arg7[%c0_15, %c0_16] : memref<1x48xf32, #tpu.memory_space<vmem>>, vector<1x48xf32>
    %20 = vector.broadcast %19 : vector<1x48xf32> to vector<32x48xf32>
    %21 = arith.addf %18, %20 : vector<32x48xf32>
    %cst_17 = arith.constant 0.000000e+00 : f32
    %22 = vector.broadcast %cst_17 : f32 to vector<32x48xf32>
    %23 = arith.maximumf %21, %22 : vector<32x48xf32>
    %24 = arith.truncf %23 : vector<32x48xf32> to vector<32x48xbf16>
    %c0_18 = arith.constant 0 : index
    %c0_19 = arith.constant 0 : index
    %25 = vector.load %arg8[%c0_18, %c0_19] : memref<48x11xbf16, #tpu.memory_space<vmem>>, vector<48x11xbf16>
    %cst_20 = arith.constant dense<0.000000e+00> : vector<32x11xf32>
    %26 = tpu.matmul %24, %25, %cst_20 {dimension_numbers = #tpu.dot_dimension_numbers<[1], [0], [0], [1], [0, 0, 1, 1], [], []>} : vector<32x48xbf16>, vector<48x11xbf16>, vector<32x11xf32> -> vector<32x11xf32>
    %c0_21 = arith.constant 0 : index
    %c0_22 = arith.constant 0 : index
    %27 = vector.load %arg9[%c0_21, %c0_22] : memref<1x11xf32, #tpu.memory_space<vmem>>, vector<1x11xf32>
    %28 = vector.broadcast %27 : vector<1x11xf32> to vector<32x11xf32>
    %29 = arith.addf %26, %28 : vector<32x11xf32>
    %30 = tpu.iota {dimensions = array<i32: 1>} : vector<32x11xi32>
    %c0_i32 = arith.constant 0 : i32
    %31 = vector.broadcast %c0_i32 : i32 to vector<32x11xi32>
    %32 = arith.cmpi eq, %30, %31 : vector<32x11xi32>
    %33 = arith.negf %29 : vector<32x11xf32>
    %34 = math.exp %33 : vector<32x11xf32>
    %cst_23 = arith.constant 1.000000e+00 : f32
    %35 = vector.broadcast %cst_23 : f32 to vector<32x11xf32>
    %36 = arith.addf %35, %34 : vector<32x11xf32>
    %37 = arith.divf %35, %36 : vector<32x11xf32>
    %38 = arith.select %32, %37, %29 : vector<32x11xi1>, vector<32x11xf32>
    %c0_24 = arith.constant 0 : index
    %c0_25 = arith.constant 0 : index
    %39 = vector.load %arg14[%c0_24, %c0_25] : memref<32x11xf32, #tpu.memory_space<vmem>>, vector<32x11xf32>
    tpu.vector_store %arg14[%c0_24, %c0_25], %38 {strides = array<i32>} : memref<32x11xf32, #tpu.memory_space<vmem>>, vector<32x11xf32>,
    %c0_26 = arith.constant 0 : index
    %c0_27 = arith.constant 0 : index
    %40 = vector.load %arg16[%c0_26, %c0_27] : memref<32x32xf32, #tpu.memory_space<vmem>>, vector<32x32xf32>
    tpu.vector_store %arg16[%c0_26, %c0_27], %15 {strides = array<i32>} : memref<32x32xf32, #tpu.memory_space<vmem>>, vector<32x32xf32>,
    %c0_28 = arith.constant 0 : index
    %c0_29 = arith.constant 0 : index
    %41 = tpu.strided_load %arg16[%c0_28, %c0_29] {strides = array<i32: 4, 1>} : memref<32x32xf32, #tpu.memory_space<vmem>>, vector<8x32xf32>
    %c1 = arith.constant 1 : index
    %c0_30 = arith.constant 0 : index
    %42 = tpu.strided_load %arg16[%c1, %c0_30] {strides = array<i32: 4, 1>} : memref<32x32xf32, #tpu.memory_space<vmem>>, vector<8x32xf32>
    %43 = arith.addf %41, %42 : vector<8x32xf32>
    %c2 = arith.constant 2 : index
    %c0_31 = arith.constant 0 : index
    %44 = tpu.strided_load %arg16[%c2, %c0_31] {strides = array<i32: 4, 1>} : memref<32x32xf32, #tpu.memory_space<vmem>>, vector<8x32xf32>
    %45 = arith.addf %43, %44 : vector<8x32xf32>
    %c3 = arith.constant 3 : index
    %c0_32 = arith.constant 0 : index
    %46 = tpu.strided_load %arg16[%c3, %c0_32] {strides = array<i32: 4, 1>} : memref<32x32xf32, #tpu.memory_space<vmem>>, vector<8x32xf32>
    %47 = arith.addf %45, %46 : vector<8x32xf32>
    %48 = arith.truncf %47 : vector<8x32xf32> to vector<8x32xbf16>
    %c0_33 = arith.constant 0 : index
    %c0_34 = arith.constant 0 : index
    %49 = vector.load %arg10[%c0_33, %c0_34] : memref<32x24xbf16, #tpu.memory_space<vmem>>, vector<32x24xbf16>
    %cst_35 = arith.constant dense<0.000000e+00> : vector<8x24xf32>
    %50 = tpu.matmul %48, %49, %cst_35 {dimension_numbers = #tpu.dot_dimension_numbers<[1], [0], [0], [1], [0, 0, 1, 1], [], []>} : vector<8x32xbf16>, vector<32x24xbf16>, vector<8x24xf32> -> vector<8x24xf32>
    %c0_36 = arith.constant 0 : index
    %c0_37 = arith.constant 0 : index
    %51 = vector.load %arg11[%c0_36, %c0_37] : memref<1x24xf32, #tpu.memory_space<vmem>>, vector<1x24xf32>
    %52 = vector.broadcast %51 : vector<1x24xf32> to vector<8x24xf32>
    %53 = arith.addf %50, %52 : vector<8x24xf32>
    %cst_38 = arith.constant 0.000000e+00 : f32
    %54 = vector.broadcast %cst_38 : f32 to vector<8x24xf32>
    %55 = arith.maximumf %53, %54 : vector<8x24xf32>
    %56 = arith.truncf %55 : vector<8x24xf32> to vector<8x24xbf16>
    %c0_39 = arith.constant 0 : index
    %c0_40 = arith.constant 0 : index
    %57 = vector.load %arg12[%c0_39, %c0_40] : memref<24x12xbf16, #tpu.memory_space<vmem>>, vector<24x12xbf16>
    %cst_41 = arith.constant dense<0.000000e+00> : vector<8x12xf32>
    %58 = tpu.matmul %56, %57, %cst_41 {dimension_numbers = #tpu.dot_dimension_numbers<[1], [0], [0], [1], [0, 0, 1, 1], [], []>} : vector<8x24xbf16>, vector<24x12xbf16>, vector<8x12xf32> -> vector<8x12xf32>
    %c0_42 = arith.constant 0 : index
    %c0_43 = arith.constant 0 : index
    %59 = vector.load %arg13[%c0_42, %c0_43] : memref<1x12xf32, #tpu.memory_space<vmem>>, vector<1x12xf32>
    %60 = vector.broadcast %59 : vector<1x12xf32> to vector<8x12xf32>
    %61 = arith.addf %58, %60 : vector<8x12xf32>
    %c0_44 = arith.constant 0 : index
    %c0_45 = arith.constant 0 : index
    %62 = vector.load %arg15[%c0_44, %c0_45] : memref<8x12xf32, #tpu.memory_space<vmem>>, vector<8x12xf32>
    tpu.vector_store %arg15[%c0_44, %c0_45], %61 {strides = array<i32>} : memref<8x12xf32, #tpu.memory_space<vmem>>, vector<8x12xf32>,
    return
  }
  func.func @transform_0(%arg0: i32) -> (i32, i32) {
    %c0_i32 = arith.constant 0 : i32
    %c0_i32_0 = arith.constant 0 : i32
    return %arg0, %c0_i32 : i32, i32
  }
  func.func @transform_1(%arg0: i32) -> (i32, i32) {
    %c0_i32 = arith.constant 0 : i32
    %c0_i32_0 = arith.constant 0 : i32
    %c0_i32_1 = arith.constant 0 : i32
    return %c0_i32, %c0_i32_0 : i32, i32
  }
  func.func @transform_2(%arg0: i32) -> (i32, i32) {
    %c0_i32 = arith.constant 0 : i32
    %c0_i32_0 = arith.constant 0 : i32
    %c0_i32_1 = arith.constant 0 : i32
    return %c0_i32, %c0_i32_0 : i32, i32
  }
  func.func @transform_3(%arg0: i32) -> (i32, i32) {
    %c0_i32 = arith.constant 0 : i32
    %c0_i32_0 = arith.constant 0 : i32
    %c0_i32_1 = arith.constant 0 : i32
    return %c0_i32, %c0_i32_0 : i32, i32
  }
  func.func @transform_4(%arg0: i32) -> (i32, i32) {
    %c0_i32 = arith.constant 0 : i32
    %c0_i32_0 = arith.constant 0 : i32
    %c0_i32_1 = arith.constant 0 : i32
    return %c0_i32, %c0_i32_0 : i32, i32
  }
  func.func @transform_5(%arg0: i32) -> (i32, i32) {
    %c0_i32 = arith.constant 0 : i32
    %c0_i32_0 = arith.constant 0 : i32
    %c0_i32_1 = arith.constant 0 : i32
    return %c0_i32, %c0_i32_0 : i32, i32
  }
  func.func @transform_6(%arg0: i32) -> (i32, i32) {
    %c0_i32 = arith.constant 0 : i32
    %c0_i32_0 = arith.constant 0 : i32
    %c0_i32_1 = arith.constant 0 : i32
    return %c0_i32, %c0_i32_0 : i32, i32
  }
  func.func @transform_7(%arg0: i32) -> (i32, i32) {
    %c0_i32 = arith.constant 0 : i32
    %c0_i32_0 = arith.constant 0 : i32
    %c0_i32_1 = arith.constant 0 : i32
    return %c0_i32, %c0_i32_0 : i32, i32
  }
  func.func @transform_8(%arg0: i32) -> (i32, i32) {
    %c0_i32 = arith.constant 0 : i32
    %c0_i32_0 = arith.constant 0 : i32
    %c0_i32_1 = arith.constant 0 : i32
    return %c0_i32, %c0_i32_0 : i32, i32
  }
  func.func @transform_9(%arg0: i32) -> (i32, i32) {
    %c0_i32 = arith.constant 0 : i32
    %c0_i32_0 = arith.constant 0 : i32
    %c0_i32_1 = arith.constant 0 : i32
    return %c0_i32, %c0_i32_0 : i32, i32
  }
  func.func @transform_10(%arg0: i32) -> (i32, i32) {
    %c0_i32 = arith.constant 0 : i32
    %c0_i32_0 = arith.constant 0 : i32
    %c0_i32_1 = arith.constant 0 : i32
    return %c0_i32, %c0_i32_0 : i32, i32
  }
  func.func @transform_11(%arg0: i32) -> (i32, i32) {
    %c0_i32 = arith.constant 0 : i32
    %c0_i32_0 = arith.constant 0 : i32
    %c0_i32_1 = arith.constant 0 : i32
    return %c0_i32, %c0_i32_0 : i32, i32
  }
  func.func @transform_12(%arg0: i32) -> (i32, i32) {
    %c0_i32 = arith.constant 0 : i32
    %c0_i32_0 = arith.constant 0 : i32
    %c0_i32_1 = arith.constant 0 : i32
    return %c0_i32, %c0_i32_0 : i32, i32
  }
  func.func @transform_13(%arg0: i32) -> (i32, i32) {
    %c0_i32 = arith.constant 0 : i32
    %c0_i32_0 = arith.constant 0 : i32
    return %arg0, %c0_i32 : i32, i32
  }
  func.func @transform_14(%arg0: i32) -> (i32, i32) {
    %c0_i32 = arith.constant 0 : i32
    %c0_i32_0 = arith.constant 0 : i32
    return %arg0, %c0_i32 : i32, i32
  }
}

</mosaic_0001>

<llo_original>
// kernel: obs_decoder_forward.1
$region0: #{obs_decoder_forward.1}
  #allocation0 [shape = 'u32[]', space=smem, size = 0x4, offset = 0x4, fixed_abs, tag = 'smem constant byte address 0x4 - core index']
  #allocation1 [shape = 'u32[72,128]{1,0:T(1,128)}', space=vmem, size = 0x9000, scoped, tag = 'internal scratch']
  #allocation2 [shape = 'f32[32,32]{1,0:T(8,128)}', space=vmem, size = 0x4000, scoped, tag = 'scratch operand']
  %s0 = inlined_call_operand.vmem [shape: bf16[32,16], index: 0, kind: input, shape index: {}]
  %s1 = inlined_call_operand.vmem [shape: bf16[16,32], index: 1, kind: input, shape index: {}]
  %s2 = inlined_call_operand.vmem [shape: f32[1,32], index: 2, kind: input, shape index: {}]
  %s3 = inlined_call_operand.vmem [shape: bf16[32,32], index: 3, kind: input, shape index: {}]
  %s4 = inlined_call_operand.vmem [shape: f32[1,32], index: 4, kind: input, shape index: {}]
  %s5 = inlined_call_operand.vmem [shape: bf16[32,48], index: 5, kind: input, shape index: {}]
  %s6 = inlined_call_operand.vmem [shape: f32[1,48], index: 6, kind: input, shape index: {}]
  %s7 = inlined_call_operand.vmem [shape: bf16[48,11], index: 7, kind: input, shape index: {}]
  %s8 = inlined_call_operand.vmem [shape: f32[1,11], index: 8, kind: input, shape index: {}]
  %s9 = inlined_call_operand.vmem [shape: bf16[32,24], index: 9, kind: input, shape index: {}]
  %s10 = inlined_call_operand.vmem [shape: f32[1,24], index: 10, kind: input, shape index: {}]
  %s11 = inlined_call_operand.vmem [shape: bf16[24,12], index: 11, kind: input, shape index: {}]
  %s12 = inlined_call_operand.vmem [shape: f32[1,12], index: 12, kind: input, shape index: {}]
  %s13 = inlined_call_operand.vmem [shape: f32[32,11], index: 13, kind: output, shape index: {0}]
  %s14 = inlined_call_operand.hbm [shape: f32[8,12], index: 14, kind: output, shape index: {1}]
  %15 = xla_tuple %s13, %s14
  %s16 = sld [smem:[#allocation0]]
  $region70: #{obs_decoder_forward.1} parent=0
    _
  %s18 = ssub.s32 1, %s16
  %s19 = scalar_select 0, %s18, %s16
  $region1: #{obs_decoder_forward.1} parent=0
    #allocation3 [shape = 'u8[4096]{0}', space=vmem, size = 0x1000, scoped, tag = 'output window, operand 1, single buffered']
    #allocation4 [shape = 's32[1]{0}', space=sflag, size = 0x4, scoped, tag = 'scoped memory for obs_decoder_forward.1']
    %20 = vsyncpa [#allocation4], 0
    // Predicated region
    $region2: #{obs_decoder_forward.1} parent=1 // pred_check
      _
    $region3: #{obs_decoder_forward.1} parent=1 // pred_check_branch
      %22 = sbr.rel (0) target = $region5
    $region4: #{obs_decoder_forward.1} parent=1 // pred_region
      _
    $region5: #{obs_decoder_forward.1} parent=1 // pred_fallthru
      _
    // Predicated region
    $region6: #{obs_decoder_forward.1} parent=1 // pred_check
      _
    $region7: #{obs_decoder_forward.1} parent=1 // pred_check_branch
      %24 = sbr.rel (0) target = $region9
    $region8: #{obs_decoder_forward.1} parent=1 // pred_region
      _
    $region9: #{obs_decoder_forward.1} parent=1 // pred_fallthru
      _
    // Predicated region
    $region10: #{obs_decoder_forward.1} parent=1 // pred_check
      _
    $region11: #{obs_decoder_forward.1} parent=1 // pred_check_branch
      %26 = sbr.rel (0) target = $region13
    $region12: #{obs_decoder_forward.1} parent=1 // pred_region
      _
    $region13: #{obs_decoder_forward.1} parent=1 // pred_fallthru
      _
    // Predicated region
    $region14: #{obs_decoder_forward.1} parent=1 // pred_check
      _
    $region15: #{obs_decoder_forward.1} parent=1 // pred_check_branch
      %28 = sbr.rel (0) target = $region17
    $region16: #{obs_decoder_forward.1} parent=1 // pred_region
      _
    $region17: #{obs_decoder_forward.1} parent=1 // pred_fallthru
      _
    // Predicated region
    $region18: #{obs_decoder_forward.1} parent=1 // pred_check
      _
    $region19: #{obs_decoder_forward.1} parent=1 // pred_check_branch
      %30 = sbr.rel (0) target = $region21
    $region20: #{obs_decoder_forward.1} parent=1 // pred_region
      _
    $region21: #{obs_decoder_forward.1} parent=1 // pred_fallthru
      _
    // Predicated region
    $region22: #{obs_decoder_forward.1} parent=1 // pred_check
      _
    $region23: #{obs_decoder_forward.1} parent=1 // pred_check_branch
      %32 = sbr.rel (0) target = $region25
    $region24: #{obs_decoder_forward.1} parent=1 // pred_region
      _
    $region25: #{obs_decoder_forward.1} parent=1 // pred_fallthru
      _
    // Predicated region
    $region26: #{obs_decoder_forward.1} parent=1 // pred_check
      _
    $region27: #{obs_decoder_forward.1} parent=1 // pred_check_branch
      %34 = sbr.rel (0) target = $region29
    $region28: #{obs_decoder_forward.1} parent=1 // pred_region
      _
    $region29: #{obs_decoder_forward.1} parent=1 // pred_fallthru
      _
    // Predicated region
    $region30: #{obs_decoder_forward.1} parent=1 // pred_check
      _
    $region31: #{obs_decoder_forward.1} parent=1 // pred_check_branch
      %36 = sbr.rel (0) target = $region33
    $region32: #{obs_decoder_forward.1} parent=1 // pred_region
      _
    $region33: #{obs_decoder_forward.1} parent=1 // pred_fallthru
      _
    // Predicated region
    $region34: #{obs_decoder_forward.1} parent=1 // pred_check
      _
    $region35: #{obs_decoder_forward.1} parent=1 // pred_check_branch
      %38 = sbr.rel (0) target = $region37
    $region36: #{obs_decoder_forward.1} parent=1 // pred_region
      _
    $region37: #{obs_decoder_forward.1} parent=1 // pred_fallthru
      _
    // Predicated region
    $region38: #{obs_decoder_forward.1} parent=1 // pred_check
      _
    $region39: #{obs_decoder_forward.1} parent=1 // pred_check_branch
      %40 = sbr.rel (0) target = $region41
    $region40: #{obs_decoder_forward.1} parent=1 // pred_region
      _
    $region41: #{obs_decoder_forward.1} parent=1 // pred_fallthru
      _
    // Predicated region
    $region42: #{obs_decoder_forward.1} parent=1 // pred_check
      _
    $region43: #{obs_decoder_forward.1} parent=1 // pred_check_branch
      %42 = sbr.rel (0) target = $region45
    $region44: #{obs_decoder_forward.1} parent=1 // pred_region
      _
    $region45: #{obs_decoder_forward.1} parent=1 // pred_fallthru
      _
    // Predicated region
    $region46: #{obs_decoder_forward.1} parent=1 // pred_check
      _
    $region47: #{obs_decoder_forward.1} parent=1 // pred_check_branch
      %44 = sbr.rel (0) target = $region49
    $region48: #{obs_decoder_forward.1} parent=1 // pred_region
      _
    $region49: #{obs_decoder_forward.1} parent=1 // pred_fallthru
      _
    // Predicated region
    $region50: #{obs_decoder_forward.1} parent=1 // pred_check
      _
    $region51: #{obs_decoder_forward.1} parent=1 // pred_check_branch
      %46 = sbr.rel (0) target = $region53
    $region52: #{obs_decoder_forward.1} parent=1 // pred_region
      _
    $region53: #{obs_decoder_forward.1} parent=1 // pred_fallthru
      _
    %v48 = vld [vmem:[%s0] sm:$0xf]
    %v49 = vld [vmem:[%s0 + $0x4] sm:$0xf]
    %v50 = vld [vmem:[%s0 + $0x8] sm:$0xf]
    %v51 = vld [vmem:[%s0 + $0xc] sm:$0xf]
    %v52 = vld [vmem:[%s1] sm:$0xf]
    %v53 = vld [vmem:[%s1 + $0x4] sm:$0xf]
    %v54 = vld [vmem:[%s2] sm:$0x1]
    %v56 = vperm.slane %v54, 0
    %v62 = vunpack.c.l.b16 %v48
    %v63 = vunpack.c.l.b16 %v49
    %v64 = vunpack.c.l.b16 %v50
    %v65 = vunpack.c.l.b16 %v51
    %v66 = vpack.c.b16 %v63, %v62
    %v67 = vpack.c.b16 %v65, %v64
    %v70 = vunpack.c.l.b16 %v52
    %v71 = vunpack.c.l.b16 %v53
    %v72 = vpack.c.b16 %v71, %v70
    %vm74 = vcmask 130048
    %v76 = vsel %vm74, %v66, 0
    %v79 = vsel %vm74, %v67, 0
    %81 = vmatpush.bf16.msra.mxu0 0
    %82 = vmatpush.bf16.msra.mxu0 0
    %83 = vmatpush.bf16.msra.mxu0 0
    %84 = vmatpush.bf16.msra.mxu0 0
    %85 = vmatpush.bf16.msra.mxu0 0
    %86 = vmatpush.bf16.msra.mxu0 0
    %87 = vmatpush.bf16.msra.mxu0 0
    %88 = vmatpush.bf16.msra.mxu0 %v72
    %89 = vmatmul.bf16.gmra.mxu0 %v76
    %v90 = vpop.f32.mrf.mxu0
    %v91 = vadd.f32 %v56, %v90
    %v92 = vpop.f32.mrf.mxu0
    %v93 = vadd.f32 %v56, %v92
    %94 = vmatmul.bf16.gmra.mxu0 %v79
    %v95 = vpop.f32.mrf.mxu0
    %v96 = vadd.f32 %v56, %v95
    %v97 = vpop.f32.mrf.mxu0
    %v98 = vadd.f32 %v56, %v97
    %99 = vdwg.mxu0
    %v100 = vmax.f32 %v91, 0.0
    %v101 = vmax.f32 %v93, 0.0
    %v102 = vmax.f32 %v96, 0.0
    %v103 = vmax.f32 %v98, 0.0
    %v104 = vpack.c.bf16 %v101, %v100
    %v105 = vpack.c.bf16 %v103, %v102
    %v106 = vld [vmem:[%s3] sm:$0xf]
    %v107 = vld [vmem:[%s3 + $0x4] sm:$0xf]
    %v108 = vld [vmem:[%s3 + $0x8] sm:$0xf]
    %v109 = vld [vmem:[%s3 + $0xc] sm:$0xf]
    %v110 = vld [vmem:[%s4] sm:$0x1]
    %v112 = vperm.slane %v110, 0
    %v118 = vunpack.c.l.b16 %v106
    %v119 = vunpack.c.l.b16 %v107
    %v120 = vunpack.c.l.b16 %v108
    %v121 = vunpack.c.l.b16 %v109
    %v122 = vpack.c.b16 %v119, %v118
    %v123 = vpack.c.b16 %v121, %v120
    %vm126 = vcmask 261120
    %v128 = vsel %vm126, %v104, 0
    %v131 = vsel %vm126, %v105, 0
    %133 = vmatpush.bf16.msra.mxu0 0
    %134 = vmatpush.bf16.msra.mxu0 0
    %135 = vmatpush.bf16.msra.mxu0 0
    %136 = vmatpush.bf16.msra.mxu0 0
    %137 = vmatpush.bf16.msra.mxu0 0
    %138 = vmatpush.bf16.msra.mxu0 0
    %139 = vmatpush.bf16.msra.mxu0 %v123
    %140 = vmatpush.bf16.msra.mxu0 %v122
    %141 = vmatmul.bf16.gmra.mxu0 %v128
    %v142 = vpop.f32.mrf.mxu0
    %v143 = vadd.f32 %v112, %v142
    %v144 = vpop.f32.mrf.mxu0
    %v145 = vadd.f32 %v112, %v144
    %146 = vmatmul.bf16.gmra.mxu0 %v131
    %v147 = vpop.f32.mrf.mxu0
    %v148 = vadd.f32 %v112, %v147
    %v149 = vpop.f32.mrf.mxu0
    %v150 = vadd.f32 %v112, %v149
    %151 = vdwg.mxu0
    %v152 = vmax.f32 %v143, 0.0
    %v153 = vmax.f32 %v145, 0.0
    %v154 = vmax.f32 %v148, 0.0
    %v155 = vmax.f32 %v150, 0.0
    %v156 = vpack.c.bf16 %v153, %v152
    %v157 = vpack.c.bf16 %v155, %v154
    %v158 = vld [vmem:[%s5] sm:$0xf]
    %v159 = vld [vmem:[%s5 + $0x4] sm:$0xf]
    %v160 = vld [vmem:[%s5 + $0x8] sm:$0xf]
    %v161 = vld [vmem:[%s5 + $0xc] sm:$0xf]
    %v162 = vld [vmem:[%s6] sm:$0x1]
    %v164 = vperm.slane %v162, 0
    %v170 = vunpack.c.l.b16 %v158
    %v171 = vunpack.c.l.b16 %v159
    %v172 = vunpack.c.l.b16 %v160
    %v173 = vunpack.c.l.b16 %v161
    %v174 = vpack.c.b16 %v171, %v170
    %v175 = vpack.c.b16 %v173, %v172
    %v179 = vsel %vm126, %v156, 0
    %v182 = vsel %vm126, %v157, 0
    %184 = vmatpush.bf16.msra.mxu0 0
    %185 = vmatpush.bf16.msra.mxu0 0
    %186 = vmatpush.bf16.msra.mxu0 0
    %187 = vmatpush.bf16.msra.mxu0 0
    %188 = vmatpush.bf16.msra.mxu0 0
    %189 = vmatpush.bf16.msra.mxu0 0
    %190 = vmatpush.bf16.msra.mxu0 %v175
    %191 = vmatpush.bf16.msra.mxu0 %v174
    %192 = vmatmul.bf16.gmra.mxu0 %v179
    %v193 = vpop.f32.mrf.mxu0
    %v194 = vadd.f32 %v164, %v193
    %v195 = vpop.f32.mrf.mxu0
    %v196 = vadd.f32 %v164, %v195
    %197 = vmatmul.bf16.gmra.mxu0 %v182
    %v198 = vpop.f32.mrf.mxu0
    %v199 = vadd.f32 %v164, %v198
    %v200 = vpop.f32.mrf.mxu0
    %v201 = vadd.f32 %v164, %v200
    %202 = vdwg.mxu0
    %v203 = vmax.f32 %v194, 0.0
    %v204 = vmax.f32 %v196, 0.0
    %v205 = vmax.f32 %v199, 0.0
    %v206 = vmax.f32 %v201, 0.0
    %v207 = vpack.c.bf16 %v204, %v203
    %v208 = vpack.c.bf16 %v206, %v205
    %v209 = vld [vmem:[%s7] sm:$0xf]
    %v210 = vld [vmem:[%s7 + $0x4] sm:$0xf]
    %v211 = vld [vmem:[%s7 + $0x8] sm:$0xf]
    %v212 = vld [vmem:[%s7 + $0xc] sm:$0xf]
    %v213 = vld [vmem:[%s7 + $0x10] sm:$0xf]
    %v214 = vld [vmem:[%s7 + $0x14] sm:$0xf]
    %v215 = vld [vmem:[%s8] sm:$0x1]
    %v217 = vperm.slane %v215, 0
    %v225 = vunpack.c.l.b16 %v209
    %v226 = vunpack.c.l.b16 %v210
    %v227 = vunpack.c.l.b16 %v211
    %v228 = vunpack.c.l.b16 %v212
    %v229 = vunpack.c.l.b16 %v213
    %v230 = vunpack.c.l.b16 %v214
    %v231 = vpack.c.b16 %v226, %v225
    %v232 = vpack.c.b16 %v228, %v227
    %v233 = vpack.c.b16 %v230, %v229
    %vm237 = vcmask 392192
    %v239 = vsel %vm237, %v207, 0
    %v242 = vsel %vm237, %v208, 0
    %244 = vmatpush.bf16.msra.mxu0 0
    %245 = vmatpush.bf16.msra.mxu0 0
    %246 = vmatpush.bf16.msra.mxu0 0
    %247 = vmatpush.bf16.msra.mxu0 0
    %248 = vmatpush.bf16.msra.mxu0 0
    %249 = vmatpush.bf16.msra.mxu0 %v233
    %250 = vmatpush.bf16.msra.mxu0 %v232
    %251 = vmatpush.bf16.msra.mxu0 %v231
    %252 = vmatmul.bf16.gmra.mxu0 %v239
    %v253 = vpop.f32.mrf.mxu0
    %v254 = vadd.f32 %v217, %v253
    %v255 = vpop.f32.mrf.mxu0
    %v256 = vadd.f32 %v217, %v255
    %257 = vmatmul.bf16.gmra.mxu0 %v242
    %v258 = vpop.f32.mrf.mxu0
    %v259 = vadd.f32 %v217, %v258
    %v260 = vpop.f32.mrf.mxu0
    %v261 = vadd.f32 %v217, %v260
    %262 = vdwg.mxu0
    %v263 = vlaneseq
    %v264 = vand.u32 %v263, 127
    %vm265 = vcmp.eq.s32.totalorder %v264, 0
    %v266 = vxor.u32 %v254, 2147483648
    %v267 = vxor.u32 %v256, 2147483648
    %v268 = vxor.u32 %v259, 2147483648
    %v269 = vxor.u32 %v261, 2147483648
    %v270 = vmul.f32 %v266, 1.442695
    %v271 = vpow.pop %v270
    %v272 = vmul.f32 %v267, 1.442695
    %v273 = vpow.pop %v272
    %v274 = vmul.f32 %v268, 1.442695
    %v275 = vpow.pop %v274
    %v276 = vmul.f32 %v269, 1.442695
    %v277 = vpow.pop %v276
    %v278 = vadd.f32 %v271, 1.0
    %v279 = vadd.f32 %v273, 1.0
    %v280 = vadd.f32 %v275, 1.0
    %v281 = vadd.f32 %v277, 1.0
    %v282 = vrcp.pop %v278
    %v283 = vmul.f32 %v278, %v282
    %v284 = vsub.f32 1.0, %v283
    %v285 = vmul.f32 %v282, %v284
    %v286 = vadd.f32 %v282, %v285
    %vm287 = vweird.f32 %v278
    %vm288 = vweird.f32 %v282
    %vm289 = vmor %vm287, %vm288
    %v290 = vsel %vm289, %v282, %v286
    %v291 = vand.u32 2147483647, %v278
    %vm292 = vcmp.eq.f32.partialorder %v291, 8.507059e+37
    %v293 = vand.u32 %v278, 2147483648
    %v294 = vor.u32 1.1754944e-38, %v293
    %v295 = vsel %vm292, %v294, %v290
    %v296 = vmul.f32 1.0, %v295
    %v297 = vrcp.pop %v279
    %v298 = vmul.f32 %v279, %v297
    %v299 = vsub.f32 1.0, %v298
    %v300 = vmul.f32 %v297, %v299
    %v301 = vadd.f32 %v297, %v300
    %vm302 = vweird.f32 %v279
    %vm303 = vweird.f32 %v297
    %vm304 = vmor %vm302, %vm303
    %v305 = vsel %vm304, %v297, %v301
    %v306 = vand.u32 2147483647, %v279
    %vm307 = vcmp.eq.f32.partialorder %v306, 8.507059e+37
    %v308 = vand.u32 %v279, 2147483648
    %v309 = vor.u32 1.1754944e-38, %v308
    %v310 = vsel %vm307, %v309, %v305
    %v311 = vmul.f32 1.0, %v310
    %v312 = vrcp.pop %v280
    %v313 = vmul.f32 %v280, %v312
    %v314 = vsub.f32 1.0, %v313
    %v315 = vmul.f32 %v312, %v314
    %v316 = vadd.f32 %v312, %v315
    %vm317 = vweird.f32 %v280
    %vm318 = vweird.f32 %v312
    %vm319 = vmor %vm317, %vm318
    %v320 = vsel %vm319, %v312, %v316
    %v321 = vand.u32 2147483647, %v280
    %vm322 = vcmp.eq.f32.partialorder %v321, 8.507059e+37
    %v323 = vand.u32 %v280, 2147483648
    %v324 = vor.u32 1.1754944e-38, %v323
    %v325 = vsel %vm322, %v324, %v320
    %v326 = vmul.f32 1.0, %v325
    %v327 = vrcp.pop %v281
    %v328 = vmul.f32 %v281, %v327
    %v329 = vsub.f32 1.0, %v328
    %v330 = vmul.f32 %v327, %v329
    %v331 = vadd.f32 %v327, %v330
    %vm332 = vweird.f32 %v281
    %vm333 = vweird.f32 %v327
    %vm334 = vmor %vm332, %vm333
    %v335 = vsel %vm334, %v327, %v331
    %v336 = vand.u32 2147483647, %v281
    %vm337 = vcmp.eq.f32.partialorder %v336, 8.507059e+37
    %v338 = vand.u32 %v281, 2147483648
    %v339 = vor.u32 1.1754944e-38, %v338
    %v340 = vsel %vm337, %v339, %v335
    %v341 = vmul.f32 1.0, %v340
    %v342 = vsel %vm265, %v296, %v254
    %v343 = vsel %vm265, %v311, %v256
    %v344 = vsel %vm265, %v326, %v259
    %v345 = vsel %vm265, %v341, %v261
    %vm346 = vcmask 89088
    %347 = vst.msk [vmem:[%s13] sm:$0xff] %vm346, %v342
    %348 = vst.msk [vmem:[%s13 + $0x8] sm:$0xff] %vm346, %v343
    %349 = vst.msk [vmem:[%s13 + $0x10] sm:$0xff] %vm346, %v344
    %350 = vst.msk [vmem:[%s13 + $0x18] sm:$0xff] %vm346, %v345
    %351 = vst.msk [vmem:[#allocation2] sm:$0xff] %vm126, %v152
    %352 = vst.msk [vmem:[#allocation2 + $0x8] sm:$0xff] %vm126, %v153
    %353 = vst.msk [vmem:[#allocation2 + $0x10] sm:$0xff] %vm126, %v154
    %354 = vst.msk [vmem:[#allocation2 + $0x18] sm:$0xff] %vm126, %v155
    %v355 = vld [vmem:[#allocation2] ss:$4 sm:$0xff]
    %s356 = scalar_lea.vmem [#allocation2], 1
    %v357 = vld [vmem:[%s356] ss:$4 sm:$0xff]
    %v358 = vadd.f32 %v355, %v357
    %s359 = scalar_lea.vmem [#allocation2], 2
    %v360 = vld [vmem:[%s359] ss:$4 sm:$0xff]
    %v361 = vadd.f32 %v358, %v360
    %s362 = scalar_lea.vmem [#allocation2], 3
    %v363 = vld [vmem:[%s362] ss:$4 sm:$0xff]
    %v364 = vadd.f32 %v361, %v363
    %v365 = vpack.c.bf16 %v364, %v364
    %v366 = vld [vmem:[%s9] sm:$0xf]
    %v367 = vld [vmem:[%s9 + $0x4] sm:$0xf]
    %v368 = vld [vmem:[%s9 + $0x8] sm:$0xf]
    %v369 = vld [vmem:[%s9 + $0xc] sm:$0xf]
    %v370 = vld [vmem:[%s10] sm:$0x1]
    %v372 = vperm.slane %v370, 0
    %v378 = vunpack.c.l.b16 %v366
    %v379 = vunpack.c.l.b16 %v367
    %v380 = vunpack.c.l.b16 %v368
    %v381 = vunpack.c.l.b16 %v369
    %v382 = vpack.c.b16 %v379, %v378
    %v383 = vpack.c.b16 %v381, %v380
    %v387 = vsel %vm126, %v365, 0
    %389 = vmatpush.bf16.msra.mxu0 0
    %390 = vmatpush.bf16.msra.mxu0 0
    %391 = vmatpush.bf16.msra.mxu0 0
    %392 = vmatpush.bf16.msra.mxu0 0
    %393 = vmatpush.bf16.msra.mxu0 0
    %394 = vmatpush.bf16.msra.mxu0 0
    %395 = vmatpush.bf16.msra.mxu0 %v383
    %396 = vmatpush.bf16.msra.mxu0 %v382
    %397 = vmatmul.bf16.gmra.mxu0 %v387
    %v398 = vpop.f32.mrf.mxu0
    %v399 = vadd.f32 %v372, %v398
    %v400 = vpop.f32.mrf.mxu0
    %401 = vdwg.mxu0
    %v402 = vmax.f32 %v399, 0.0
    %v403 = vpack.c.bf16 %v402, %v402
    %v404 = vld [vmem:[%s11] sm:$0xf]
    %v405 = vld [vmem:[%s11 + $0x4] sm:$0xf]
    %v406 = vld [vmem:[%s11 + $0x8] sm:$0xf]
    %v407 = vld [vmem:[%s12] sm:$0x1]
    %v409 = vperm.slane %v407, 0
    %v414 = vunpack.c.l.b16 %v404
    %v415 = vunpack.c.l.b16 %v405
    %v416 = vunpack.c.l.b16 %v406
    %v417 = vpack.c.b16 %v415, %v414
    %v418 = vpack.c.b16 %v416, %v416
    %vm420 = vcmask 195584
    %v422 = vsel %vm420, %v403, 0
    %vm424 = vcmask 1043456
    %v426 = vsel %vm424, %v418, 0
    %428 = vmatpush.bf16.msra.mxu0 0
    %429 = vmatpush.bf16.msra.mxu0 0
    %430 = vmatpush.bf16.msra.mxu0 0
    %431 = vmatpush.bf16.msra.mxu0 0
    %432 = vmatpush.bf16.msra.mxu0 0
    %433 = vmatpush.bf16.msra.mxu0 0
    %434 = vmatpush.bf16.msra.mxu0 %v426
    %435 = vmatpush.bf16.msra.mxu0 %v417
    %436 = vmatmul.bf16.gmra.mxu0 %v422
    %v437 = vpop.f32.mrf.mxu0
    %v438 = vadd.f32 %v409, %v437
    %v439 = vpop.f32.mrf.mxu0
    %440 = vdwg.mxu0
    %vm441 = vcmask 97280
    %442 = vst.msk [vmem:[#allocation3] sm:$0xff] %vm441, %v438
    // Predicated region
    $region54: #{obs_decoder_forward.1} parent=1 // pred_check
      _
    $region55: #{obs_decoder_forward.1} parent=1 // pred_check_branch
      %444 = sbr.rel (0) target = $region57
    $region56: #{obs_decoder_forward.1} parent=1 // pred_region
      _
    $region57: #{obs_decoder_forward.1} parent=1 // pred_fallthru
      _
    // Predicated region
    $region58: #{obs_decoder_forward.1} parent=1 // pred_check
      _
    $region59: #{obs_decoder_forward.1} parent=1 // pred_check_branch
      %446 = sbr.rel (0) target = $region61
    $region60: #{obs_decoder_forward.1} parent=1 // pred_region
      %448 = vsyncadd [#allocation4], 0
      %s450 = sshll.u32 [#allocation3], 4
      %s451 = int_to_ptr.vmem [resolvable:$true] %s450
      %s452 = sshll.u32 %s14, 4
      %s453 = int_to_ptr.hbm [resolvable:$true] %s452
      %455 = dma.vmem_to_hbm [thread:$0]  %s451, 128, %s453, [#allocation4]
    $region61: #{obs_decoder_forward.1} parent=1 // pred_fallthru
      _
    // Predicated region
    $region62: #{obs_decoder_forward.1} parent=1 // pred_check
      _
    $region63: #{obs_decoder_forward.1} parent=1 // pred_check_branch
      %457 = sbr.rel (0) target = $region65
    $region64: #{obs_decoder_forward.1} parent=1 // pred_region
      _
    $region65: #{obs_decoder_forward.1} parent=1 // pred_fallthru
      _
    // Predicated region
    $region66: #{obs_decoder_forward.1} parent=1 // pred_check
      _
    $region67: #{obs_decoder_forward.1} parent=1 // pred_check_branch
      %459 = sbr.rel (0) target = $region69
    $region68: #{obs_decoder_forward.1} parent=1 // pred_region
      %461 = dma.done [#allocation4], 128
    $region69: #{obs_decoder_forward.1} parent=1 // pred_fallthru
      _
    %462 = vsyncpa [#allocation4], 1

</llo_original>
